<compile_context>
chip_gen: v6e
topology: v6e:2x2x1
jax: 0.10.0
libtpu: 0.0.40
codegen_flags: <defaults>
</compile_context>

<pallas_src>
import functools
import math

import jax
import jax.numpy as jnp
from jax import lax
from jax.experimental import pallas as pl
from jax.experimental.pallas import tpu as pltpu


# ---------------------------------------------------------------------------
# pass 1: conv (banded matmuls) + per-batch partial BN statistics
# ---------------------------------------------------------------------------
def conv_stats_kernel(xp_ref, w_ref, fold_ref, y_ref, s_ref, *, H):
    # xp_ref  : (1, H+2, (W+2)*Cin)    zero-padded input slab, lanes = (w, cin)
    # w_ref   : (3, (W+2)*Cin, W*Cout) block-banded conv weights (one per ky)
    # fold_ref: (W*Cout, Cout)         lane-fold matrix (sums the W copies of each channel)
    # y_ref   : (1, H, W*Cout)         conv output slab, lanes = (w, cout)
    # s_ref   : (1, 2, Cout)           per-batch [sum, sum-of-squares] per channel
    xp = xp_ref[0]                                                  # (H+2, (W+2)*Cin)
    acc = jnp.dot(xp[0:H, :], w_ref[0], preferred_element_type=jnp.float32)
    acc = acc + jnp.dot(xp[1:H + 1, :], w_ref[1], preferred_element_type=jnp.float32)
    acc = acc + jnp.dot(xp[2:H + 2, :], w_ref[2], preferred_element_type=jnp.float32)
    y_ref[0] = acc                                                  # lane-dense store

    # Partial BN stats: fold the (w, cout) lane interleave down to cout with a tiny matmul
    # (avoids a lane->sublane reshape in-kernel).
    fold = fold_ref[...]
    sum_c = jnp.sum(jnp.dot(acc, fold, preferred_element_type=jnp.float32),
                    axis=0, keepdims=True)                          # (1, Cout)
    sumsq_c = jnp.sum(jnp.dot(acc * acc, fold, preferred_element_type=jnp.float32),
                      axis=0, keepdims=True)                        # (1, Cout)
    s_ref[0] = jnp.concatenate([sum_c, sumsq_c], axis=0)            # (2, Cout)


# ---------------------------------------------------------------------------
# pass 2: BN affine (precomputed scale/shift) + exact GELU, lane-dense
# ---------------------------------------------------------------------------
def bn_gelu_kernel(y_ref, scale_ref, shift_ref, o_ref):
    # y_ref/o_ref: (row_tile, W*Cout);  scale_ref/shift_ref: (1, W*Cout)
    y = y_ref[...] * scale_ref[...] + shift_ref[...]
    # exact GELU (erf form; matches torch nn.GELU(approximate='none'))
    o_ref[...] = 0.5 * y * (1.0 + lax.erf(y * (1.0 / math.sqrt(2.0))))


def _banded_weights(w_oihw, W):
    """(Cout, Cin, 3, 3) -> (3, (W+2)*Cin, W*Cout) block-banded matrices, one per ky.

    bigw[ky][(x+kx)*Cin + c, x*Cout + co] = w[co, c, ky, kx], so a single matmul of one padded
    input row-slab against bigw[ky] produces the ky-contribution of every (x, cout) output lane.
    """
    Cout, Cin, _, _ = w_oihw.shape
    w_t = jnp.transpose(w_oihw, (2, 3, 1, 0)).astype(jnp.float32)   # (3, 3, Cin, Cout)
    eye = jnp.eye(W + 2, dtype=jnp.float32)
    rows = []
    for ky in range(3):
        acc = jnp.zeros(((W + 2) * Cin, W * Cout), jnp.float32)
        for kx in range(3):
            sel = eye[:, kx:kx + W]                                 # sel[x+kx, x] = 1
            acc = acc + jnp.kron(sel, w_t[ky, kx])
        rows.append(acc)
    return jnp.stack(rows, axis=0)


def base_layer(x_nchw, w_oihw, gamma, beta, eps=1e-5):
    """x_nchw: (N, Cin, H, W); w_oihw: (Cout, Cin, 3, 3); gamma/beta: (Cout,). Returns NCHW."""
    N, Cin, H, W = x_nchw.shape
    Cout = w_oihw.shape[0]
    lanes = W * Cout                   # 128 for the demo shape -> fully unmasked stores

    # TODO(synk): the 1-pixel halo pad and NCHW<->slab conversions are still wrapper-side XLA
    # ops; folding the halo into the kernel with edge masking (plus H row-band tiling for very
    # large H) would remove these extra HBM passes.
    x_nhwc = jnp.transpose(x_nchw, (0, 2, 3, 1)).astype(jnp.float32)
    xp = jnp.pad(x_nhwc, ((0, 0), (1, 1), (1, 1), (0, 0)))
    xp = xp.reshape(N, H + 2, (W + 2) * Cin)                        # lane-dense input slab

    bigw = _banded_weights(w_oihw, W)                               # (3, (W+2)*Cin, lanes)
    fold = jnp.tile(jnp.eye(Cout, dtype=jnp.float32), (W, 1))       # (lanes, Cout)

    conv_out, stats = pl.pallas_call(
        functools.partial(conv_stats_kernel, H=H),
        grid=(N,),
        in_specs=[
            pl.BlockSpec((1, H + 2, (W + 2) * Cin), lambda n: (n, 0, 0)),
            pl.BlockSpec((3, (W + 2) * Cin, lanes), lambda n: (0, 0, 0)),
            pl.BlockSpec((lanes, Cout), lambda n: (0, 0)),
        ],
        out_specs=[
            pl.BlockSpec((1, H, lanes), lambda n: (n, 0, 0)),
            pl.BlockSpec((1, 2, Cout), lambda n: (n, 0, 0)),
        ],
        out_shape=[
            jax.ShapeDtypeStruct((N, H, lanes), jnp.float32),
            jax.ShapeDtypeStruct((N, 2, Cout), jnp.float32),
        ],
        compiler_params=pltpu.CompilerParams(
            dimension_semantics=("parallel",),
            vmem_limit_bytes=32 * 1024 * 1024,
        ),
    )(xp, bigw, fold)

    # Reduce partial stats -> per-channel BN affine (tiny, done in XLA).
    # BatchNorm2d training mode: biased batch variance over (N, H, W).
    count = float(N * H * W)
    mean = jnp.sum(stats[:, 0, :], axis=0) / count                  # (Cout,)
    var = jnp.maximum(jnp.sum(stats[:, 1, :], axis=0) / count - mean * mean, 0.0)
    invstd = lax.rsqrt(var + eps)
    scale = gamma.astype(jnp.float32) * invstd
    shift = beta.astype(jnp.float32) - mean * scale
    scale_l = jnp.tile(scale, (W,)).reshape(1, lanes)               # match (w, cout) interleave
    shift_l = jnp.tile(shift, (W,)).reshape(1, lanes)

    rows = N * H
    row_tile = rows
    for cand in (1024, 512, 256, 128, 64, 32, 16, 8):
        if rows % cand == 0:
            row_tile = cand
            break

    out2d = pl.pallas_call(
        bn_gelu_kernel,
        grid=(rows // row_tile,),
        in_specs=[
            pl.BlockSpec((row_tile, lanes), lambda i: (i, 0)),
            pl.BlockSpec((1, lanes), lambda i: (0, 0)),
            pl.BlockSpec((1, lanes), lambda i: (0, 0)),
        ],
        out_specs=pl.BlockSpec((row_tile, lanes), lambda i: (i, 0)),
        out_shape=jax.ShapeDtypeStruct((rows, lanes), jnp.float32),
        compiler_params=pltpu.CompilerParams(
            dimension_semantics=("parallel",),
            vmem_limit_bytes=32 * 1024 * 1024,
        ),
    )(conv_out.reshape(rows, lanes), scale_l, shift_l)

    out_nhwc = out2d.reshape(N, H, W, Cout)
    return jnp.transpose(out_nhwc, (0, 3, 1, 2))                    # back to NCHW


def reference(x_nchw, w_oihw, gamma, beta, eps=1e-5):
    """Pure-JAX reference mirroring the PyTorch module in train mode."""
    y = lax.conv_general_dilated(
        x_nchw.astype(jnp.float32), w_oihw.astype(jnp.float32),
        window_strides=(1, 1), padding=((1, 1), (1, 1)),
        dimension_numbers=("NCHW", "OIHW", "NCHW"))
    mean = jnp.mean(y, axis=(0, 2, 3), keepdims=True)
    var = jnp.mean((y - mean) ** 2, axis=(0, 2, 3), keepdims=True)
    yh = (y - mean) * lax.rsqrt(var + eps)
    yh = yh * gamma.reshape(1, -1, 1, 1) + beta.reshape(1, -1, 1, 1)
    return 0.5 * yh * (1.0 + lax.erf(yh / jnp.sqrt(2.0)))


if __name__ == "__main__":
    N, Cin, Cout, H, W = 2, 4, 8, 16, 16

    key = jax.random.PRNGKey(0)
    kx, kw, kg, kb = jax.random.split(key, 4)

    x = jax.random.normal(kx, (N, Cin, H, W), dtype=jnp.float32)
    # Deterministic synthetic parameters (shapes match nn.Conv2d / nn.BatchNorm2d)
    w = 0.1 * jax.random.normal(kw, (Cout, Cin, 3, 3), dtype=jnp.float32)
    gamma = 1.0 + 0.1 * jax.random.normal(kg, (Cout,), dtype=jnp.float32)
    beta = 0.1 * jax.random.normal(kb, (Cout,), dtype=jnp.float32)

    fn = jax.jit(base_layer)
    out = jax.block_until_ready(fn(x, w, gamma, beta))
    ref = jax.block_until_ready(reference(x, w, gamma, beta))

    assert out.shape == (N, Cout, H, W), out.shape
    err = float(jnp.max(jnp.abs(out - ref)))
    assert jnp.allclose(out, ref, rtol=1e-4, atol=1e-4), err
    print("KERNEL_OK")
</pallas_src>

<mosaic_0001>
module attributes {stable_mosaic.version = 11 : i64} {
  func.func @conv_stats_kernel(%arg0: i32, %arg1: memref<1x18x72xf32, #tpu.memory_space<vmem>>, %arg2: memref<3x72x128xf32, #tpu.memory_space<vmem>>, %arg3: memref<128x8xf32, #tpu.memory_space<vmem>>, %arg4: memref<1x16x128xf32, #tpu.memory_space<vmem>>, %arg5: memref<1x2x8xf32, #tpu.memory_space<vmem>>) attributes {dimension_semantics = [#tpu.dimension_semantics<parallel>], iteration_bounds = array<i64: 2>, scalar_prefetch = 0 : i64, scratch_operands = 0 : i64, tpu.core_type = #tpu.core_type<tc>, window_params = [{transform_indices = @transform_0, window_bounds = array<i64: 1, 18, 72>}, {pipeline_mode = #tpu.pipeline_mode<synchronous>, transform_indices = @transform_1, window_bounds = array<i64: 3, 72, 128>}, {pipeline_mode = #tpu.pipeline_mode<synchronous>, transform_indices = @transform_2, window_bounds = array<i64: 128, 8>}, {transform_indices = @transform_3, window_bounds = array<i64: 1, 16, 128>}, {transform_indices = @transform_4, window_bounds = array<i64: 1, 2, 8>}]} {
    %c0 = arith.constant 0 : index
    %c0_0 = arith.constant 0 : index
    %c0_1 = arith.constant 0 : index
    %0 = vector.load %arg1[%c0, %c0_0, %c0_1] : memref<1x18x72xf32, #tpu.memory_space<vmem>>, vector<1x18x72xf32>
    %1 = vector.shape_cast %0 : vector<1x18x72xf32> to vector<18x72xf32>
    %2 = vector.extract_strided_slice %1 {offsets = [0, 0], sizes = [16, 72], strides = [1, 1]} : vector<18x72xf32> to vector<16x72xf32>
    %c0_2 = arith.constant 0 : index
    %c0_3 = arith.constant 0 : index
    %c0_4 = arith.constant 0 : index
    %3 = vector.load %arg2[%c0_2, %c0_3, %c0_4] : memref<3x72x128xf32, #tpu.memory_space<vmem>>, vector<1x72x128xf32>
    %4 = vector.shape_cast %3 : vector<1x72x128xf32> to vector<72x128xf32>
    %cst = arith.constant dense<0.000000e+00> : vector<16x128xf32>
    %5 = tpu.matmul %2, %4, %cst {dimension_numbers = #tpu.dot_dimension_numbers<[1], [0], [0], [1], [0, 0, 1, 1], [], []>} : vector<16x72xf32>, vector<72x128xf32>, vector<16x128xf32> -> vector<16x128xf32>
    %6 = vector.extract_strided_slice %1 {offsets = [1, 0], sizes = [16, 72], strides = [1, 1]} : vector<18x72xf32> to vector<16x72xf32>
    %c1 = arith.constant 1 : index
    %c0_5 = arith.constant 0 : index
    %c0_6 = arith.constant 0 : index
    %7 = vector.load %arg2[%c1, %c0_5, %c0_6] : memref<3x72x128xf32, #tpu.memory_space<vmem>>, vector<1x72x128xf32>
    %8 = vector.shape_cast %7 : vector<1x72x128xf32> to vector<72x128xf32>
    %cst_7 = arith.constant dense<0.000000e+00> : vector<16x128xf32>
    %9 = tpu.matmul %6, %8, %cst_7 {dimension_numbers = #tpu.dot_dimension_numbers<[1], [0], [0], [1], [0, 0, 1, 1], [], []>} : vector<16x72xf32>, vector<72x128xf32>, vector<16x128xf32> -> vector<16x128xf32>
    %10 = arith.addf %5, %9 : vector<16x128xf32>
    %11 = vector.extract_strided_slice %1 {offsets = [2, 0], sizes = [16, 72], strides = [1, 1]} : vector<18x72xf32> to vector<16x72xf32>
    %c2 = arith.constant 2 : index
    %c0_8 = arith.constant 0 : index
    %c0_9 = arith.constant 0 : index
    %12 = vector.load %arg2[%c2, %c0_8, %c0_9] : memref<3x72x128xf32, #tpu.memory_space<vmem>>, vector<1x72x128xf32>
    %13 = vector.shape_cast %12 : vector<1x72x128xf32> to vector<72x128xf32>
    %cst_10 = arith.constant dense<0.000000e+00> : vector<16x128xf32>
    %14 = tpu.matmul %11, %13, %cst_10 {dimension_numbers = #tpu.dot_dimension_numbers<[1], [0], [0], [1], [0, 0, 1, 1], [], []>} : vector<16x72xf32>, vector<72x128xf32>, vector<16x128xf32> -> vector<16x128xf32>
    %15 = arith.addf %10, %14 : vector<16x128xf32>
    %c0_11 = arith.constant 0 : index
    %c0_12 = arith.constant 0 : index
    %c0_13 = arith.constant 0 : index
    %16 = vector.load %arg4[%c0_11, %c0_12, %c0_13] : memref<1x16x128xf32, #tpu.memory_space<vmem>>, vector<1x16x128xf32>
    %17 = vector.shape_cast %16 : vector<1x16x128xf32> to vector<16x128xf32>
    %18 = vector.shape_cast %15 : vector<16x128xf32> to vector<1x16x128xf32>
    tpu.vector_store %arg4[%c0_11, %c0_12, %c0_13], %18 {strides = array<i32>} : memref<1x16x128xf32, #tpu.memory_space<vmem>>, vector<1x16x128xf32>,
    %c0_14 = arith.constant 0 : index
    %c0_15 = arith.constant 0 : index
    %19 = vector.load %arg3[%c0_14, %c0_15] : memref<128x8xf32, #tpu.memory_space<vmem>>, vector<128x8xf32>
    %cst_16 = arith.constant dense<0.000000e+00> : vector<16x8xf32>
    %20 = tpu.matmul %15, %19, %cst_16 {dimension_numbers = #tpu.dot_dimension_numbers<[1], [0], [0], [1], [0, 0, 1, 1], [], []>} : vector<16x128xf32>, vector<128x8xf32>, vector<16x8xf32> -> vector<16x8xf32>
    %cst_17 = arith.constant dense<0.000000e+00> : vector<8xf32>
    %21 = vector.multi_reduction <add>, %20, %cst_17 [0] : vector<16x8xf32> to vector<8xf32>
    %22 = vector.shape_cast %21 : vector<8xf32> to vector<1x8xf32>
    %23 = arith.mulf %15, %15 : vector<16x128xf32>
    %cst_18 = arith.constant dense<0.000000e+00> : vector<16x8xf32>
    %24 = tpu.matmul %23, %19, %cst_18 {dimension_numbers = #tpu.dot_dimension_numbers<[1], [0], [0], [1], [0, 0, 1, 1], [], []>} : vector<16x128xf32>, vector<128x8xf32>, vector<16x8xf32> -> vector<16x8xf32>
    %cst_19 = arith.constant dense<0.000000e+00> : vector<8xf32>
    %25 = vector.multi_reduction <add>, %24, %cst_19 [0] : vector<16x8xf32> to vector<8xf32>
    %26 = vector.shape_cast %25 : vector<8xf32> to vector<1x8xf32>
    %27 = tpu.concatenate %22, %26 in 0 : vector<1x8xf32>, vector<1x8xf32> -> vector<2x8xf32>
    %c0_20 = arith.constant 0 : index
    %c0_21 = arith.constant 0 : index
    %c0_22 = arith.constant 0 : index
    %28 = vector.load %arg5[%c0_20, %c0_21, %c0_22] : memref<1x2x8xf32, #tpu.memory_space<vmem>>, vector<1x2x8xf32>
    %29 = vector.shape_cast %28 : vector<1x2x8xf32> to vector<2x8xf32>
    %30 = vector.shape_cast %27 : vector<2x8xf32> to vector<1x2x8xf32>
    tpu.vector_store %arg5[%c0_20, %c0_21, %c0_22], %30 {strides = array<i32>} : memref<1x2x8xf32, #tpu.memory_space<vmem>>, vector<1x2x8xf32>,
    return
  }
  func.func @transform_0(%arg0: i32) -> (i32, i32, i32) {
    %c0_i32 = arith.constant 0 : i32
    %c0_i32_0 = arith.constant 0 : i32
    %c0_i32_1 = arith.constant 0 : i32
    return %arg0, %c0_i32, %c0_i32_0 : i32, i32, i32
  }
  func.func @transform_1(%arg0: i32) -> (i32, i32, i32) {
    %c0_i32 = arith.constant 0 : i32
    %c0_i32_0 = arith.constant 0 : i32
    %c0_i32_1 = arith.constant 0 : i32
    %c0_i32_2 = arith.constant 0 : i32
    return %c0_i32, %c0_i32_0, %c0_i32_1 : i32, i32, i32
  }
  func.func @transform_2(%arg0: i32) -> (i32, i32) {
    %c0_i32 = arith.constant 0 : i32
    %c0_i32_0 = arith.constant 0 : i32
    %c0_i32_1 = arith.constant 0 : i32
    return %c0_i32, %c0_i32_0 : i32, i32
  }
  func.func @transform_3(%arg0: i32) -> (i32, i32, i32) {
    %c0_i32 = arith.constant 0 : i32
    %c0_i32_0 = arith.constant 0 : i32
    %c0_i32_1 = arith.constant 0 : i32
    return %arg0, %c0_i32, %c0_i32_0 : i32, i32, i32
  }
  func.func @transform_4(%arg0: i32) -> (i32, i32, i32) {
    %c0_i32 = arith.constant 0 : i32
    %c0_i32_0 = arith.constant 0 : i32
    %c0_i32_1 = arith.constant 0 : i32
    return %arg0, %c0_i32, %c0_i32_0 : i32, i32, i32
  }
}

module attributes {stable_mosaic.version = 11 : i64} {
  func.func @bn_gelu_kernel(%arg0: i32, %arg1: memref<32x128xf32, #tpu.memory_space<vmem>>, %arg2: memref<1x128xf32, #tpu.memory_space<vmem>>, %arg3: memref<1x128xf32, #tpu.memory_space<vmem>>, %arg4: memref<32x128xf32, #tpu.memory_space<vmem>>) attributes {dimension_semantics = [#tpu.dimension_semantics<parallel>], iteration_bounds = array<i64: 1>, scalar_prefetch = 0 : i64, scratch_operands = 0 : i64, tpu.core_type = #tpu.core_type<tc>, window_params = [{transform_indices = @transform_0, window_bounds = array<i64: 32, 128>}, {pipeline_mode = #tpu.pipeline_mode<synchronous>, transform_indices = @transform_1, window_bounds = array<i64: 1, 128>}, {pipeline_mode = #tpu.pipeline_mode<synchronous>, transform_indices = @transform_2, window_bounds = array<i64: 1, 128>}, {transform_indices = @transform_3, window_bounds = array<i64: 32, 128>}]} {
    %c0 = arith.constant 0 : index
    %c0_0 = arith.constant 0 : index
    %0 = vector.load %arg1[%c0, %c0_0] : memref<32x128xf32, #tpu.memory_space<vmem>>, vector<32x128xf32>
    %c0_1 = arith.constant 0 : index
    %c0_2 = arith.constant 0 : index
    %1 = vector.load %arg2[%c0_1, %c0_2] : memref<1x128xf32, #tpu.memory_space<vmem>>, vector<1x128xf32>
    %2 = vector.broadcast %1 : vector<1x128xf32> to vector<32x128xf32>
    %3 = arith.mulf %0, %2 : vector<32x128xf32>
    %c0_3 = arith.constant 0 : index
    %c0_4 = arith.constant 0 : index
    %4 = vector.load %arg3[%c0_3, %c0_4] : memref<1x128xf32, #tpu.memory_space<vmem>>, vector<1x128xf32>
    %5 = vector.broadcast %4 : vector<1x128xf32> to vector<32x128xf32>
    %6 = arith.addf %3, %5 : vector<32x128xf32>
    %cst = arith.constant 5.000000e-01 : f32
    %7 = vector.broadcast %cst : f32 to vector<32x128xf32>
    %8 = arith.mulf %7, %6 : vector<32x128xf32>
    %cst_5 = arith.constant 0.707106769 : f32
    %9 = vector.broadcast %cst_5 : f32 to vector<32x128xf32>
    %10 = arith.mulf %6, %9 : vector<32x128xf32>
    %11 = math.erf %10 : vector<32x128xf32>
    %cst_6 = arith.constant 1.000000e+00 : f32
    %12 = vector.broadcast %cst_6 : f32 to vector<32x128xf32>
    %13 = arith.addf %12, %11 : vector<32x128xf32>
    %14 = arith.mulf %8, %13 : vector<32x128xf32>
    %c0_7 = arith.constant 0 : index
    %c0_8 = arith.constant 0 : index
    %15 = vector.load %arg4[%c0_7, %c0_8] : memref<32x128xf32, #tpu.memory_space<vmem>>, vector<32x128xf32>
    tpu.vector_store %arg4[%c0_7, %c0_8], %14 {strides = array<i32>} : memref<32x128xf32, #tpu.memory_space<vmem>>, vector<32x128xf32>,
    return
  }
  func.func @transform_0(%arg0: i32) -> (i32, i32) {
    %c0_i32 = arith.constant 0 : i32
    %c0_i32_0 = arith.constant 0 : i32
    return %arg0, %c0_i32 : i32, i32
  }
  func.func @transform_1(%arg0: i32) -> (i32, i32) {
    %c0_i32 = arith.constant 0 : i32
    %c0_i32_0 = arith.constant 0 : i32
    %c0_i32_1 = arith.constant 0 : i32
    return %c0_i32, %c0_i32_0 : i32, i32
  }
  func.func @transform_2(%arg0: i32) -> (i32, i32) {
    %c0_i32 = arith.constant 0 : i32
    %c0_i32_0 = arith.constant 0 : i32
    %c0_i32_1 = arith.constant 0 : i32
    return %c0_i32, %c0_i32_0 : i32, i32
  }
  func.func @transform_3(%arg0: i32) -> (i32, i32) {
    %c0_i32 = arith.constant 0 : i32
    %c0_i32_0 = arith.constant 0 : i32
    return %arg0, %c0_i32 : i32, i32
  }
}

</mosaic_0001>

<llo_original>
// kernel: tile.23
$region0: #{tile.23}
  #allocation0 [shape = 's32[1]{0}', space=sflag, size = 0x4, scoped, tag = 'scoped memory for tile.23']
  %s0 = inlined_call_operand.vmem [shape: f32[8], index: 0, kind: input, shape index: {}]
  %s1 = inlined_call_operand.vmem [shape: f32[16,8], index: 1, kind: output, shape index: {}]
  // Predicated region
  $region2: #{tile.23} parent=0 // pred_check
    _
  $region3: #{tile.23} parent=0 // pred_check_branch
    %3 = sbr.rel (0) target = $region5
  $region4: #{tile.23} parent=0 // pred_region
    _
  $region5: #{tile.23} parent=0 // pred_fallthru
    _
  %v4 = vld [vmem:[%s0] ss:$0 sm:$0xff]
  %5 = vst [vmem:[%s1] sm:$0xff] %v4
  %s6 = scalar_lea.vmem %s1, 8
  %7 = vst [vmem:[%s6] sm:$0xff] %v4

// kernel: tile.24
$region0: #{tile.24}
  %s0 = inlined_call_operand.vmem [shape: f32[16,8], index: 0, kind: input, shape index: {}]
  %s1 = inlined_call_operand.vmem [shape: f32[1,128], index: 1, kind: output, shape index: {}]
  $region1: #{tile.24} parent=0
    #allocation0 [shape = 'u8[4096]{0}', space=vmem, size = 0x1000, scoped, tag = 'scoped mem for output reshape']
    %v2 = vld [vmem:[%s0] sm:$0x1]
    %vm3 = vcmask 64512
    %4 = vst.msk [vmem:[#allocation0] sm:$0x1] %vm3, %v2
    %s5 = scalar_lea.vmem %s0, 15
    %v6 = vld [vmem:[%s5] sm:$0x1]
    %7 = vrot.lane.b32.xlu0 %v6, 120
    %v8 = vpop.permute.xlu0 %7
    %vm9 = vcmask 1048512
    %10 = vst.msk [vmem:[#allocation0] sm:$0x1] %vm9, %v8
    %s11 = scalar_lea.vmem %s0, 14
    %v12 = vld [vmem:[%s11] sm:$0x1]
    %13 = vrot.lane.b32.xlu0 %v12, 112
    %v14 = vpop.permute.xlu0 %13
    %vm15 = vcmask 982912
    %16 = vst.msk [vmem:[#allocation0] sm:$0x1] %vm15, %v14
    %s17 = scalar_lea.vmem %s0, 13
    %v18 = vld [vmem:[%s17] sm:$0x1]
    %19 = vrot.lane.b32.xlu0 %v18, 104
    %v20 = vpop.permute.xlu0 %19
    %vm21 = vcmask 917312
    %22 = vst.msk [vmem:[#allocation0] sm:$0x1] %vm21, %v20
    %s23 = scalar_lea.vmem %s0, 12
    %v24 = vld [vmem:[%s23] sm:$0x1]
    %25 = vrot.lane.b32.xlu0 %v24, 96
    %v26 = vpop.permute.xlu0 %25
    %vm27 = vcmask 851712
    %28 = vst.msk [vmem:[#allocation0] sm:$0x1] %vm27, %v26
    %s29 = scalar_lea.vmem %s0, 11
    %v30 = vld [vmem:[%s29] sm:$0x1]
    %31 = vrot.lane.b32.xlu0 %v30, 88
    %v32 = vpop.permute.xlu0 %31
    %vm33 = vcmask 786112
    %34 = vst.msk [vmem:[#allocation0] sm:$0x1] %vm33, %v32
    %s35 = scalar_lea.vmem %s0, 10
    %v36 = vld [vmem:[%s35] sm:$0x1]
    %37 = vrot.lane.b32.xlu0 %v36, 80
    %v38 = vpop.permute.xlu0 %37
    %vm39 = vcmask 720512
    %40 = vst.msk [vmem:[#allocation0] sm:$0x1] %vm39, %v38
    %s41 = scalar_lea.vmem %s0, 9
    %v42 = vld [vmem:[%s41] sm:$0x1]
    %43 = vrot.lane.b32.xlu0 %v42, 72
    %v44 = vpop.permute.xlu0 %43
    %vm45 = vcmask 654912
    %46 = vst.msk [vmem:[#allocation0] sm:$0x1] %vm45, %v44
    %s47 = scalar_lea.vmem %s0, 8
    %v48 = vld [vmem:[%s47] sm:$0x1]
    %49 = vrot.lane.b32.xlu0 %v48, 64
    %v50 = vpop.permute.xlu0 %49
    %vm51 = vcmask 589312
    %52 = vst.msk [vmem:[#allocation0] sm:$0x1] %vm51, %v50
    %s53 = scalar_lea.vmem %s0, 7
    %v54 = vld [vmem:[%s53] sm:$0x1]
    %55 = vrot.lane.b32.xlu0 %v54, 56
    %v56 = vpop.permute.xlu0 %55
    %vm57 = vcmask 523712
    %58 = vst.msk [vmem:[#allocation0] sm:$0x1] %vm57, %v56
    %s59 = scalar_lea.vmem %s0, 6
    %v60 = vld [vmem:[%s59] sm:$0x1]
    %61 = vrot.lane.b32.xlu0 %v60, 48
    %v62 = vpop.permute.xlu0 %61
    %vm63 = vcmask 458112
    %64 = vst.msk [vmem:[#allocation0] sm:$0x1] %vm63, %v62
    %s65 = scalar_lea.vmem %s0, 5
    %v66 = vld [vmem:[%s65] sm:$0x1]
    %67 = vrot.lane.b32.xlu0 %v66, 40
    %v68 = vpop.permute.xlu0 %67
    %vm69 = vcmask 392512
    %70 = vst.msk [vmem:[#allocation0] sm:$0x1] %vm69, %v68
    %s71 = scalar_lea.vmem %s0, 4
    %v72 = vld [vmem:[%s71] sm:$0x1]
    %73 = vrot.lane.b32.xlu0 %v72, 32
    %v74 = vpop.permute.xlu0 %73
    %vm75 = vcmask 326912
    %76 = vst.msk [vmem:[#allocation0] sm:$0x1] %vm75, %v74
    %s77 = scalar_lea.vmem %s0, 3
    %v78 = vld [vmem:[%s77] sm:$0x1]
    %79 = vrot.lane.b32.xlu0 %v78, 24
    %v80 = vpop.permute.xlu0 %79
    %vm81 = vcmask 261312
    %82 = vst.msk [vmem:[#allocation0] sm:$0x1] %vm81, %v80
    %s83 = scalar_lea.vmem %s0, 2
    %v84 = vld [vmem:[%s83] sm:$0x1]
    %85 = vrot.lane.b32.xlu0 %v84, 16
    %v86 = vpop.permute.xlu0 %85
    %vm87 = vcmask 195712
    %88 = vst.msk [vmem:[#allocation0] sm:$0x1] %vm87, %v86
    %s89 = scalar_lea.vmem %s0, 1
    %v90 = vld [vmem:[%s89] sm:$0x1]
    %91 = vrot.lane.b32.xlu0 %v90, 8
    %v92 = vpop.permute.xlu0 %91
    %vm93 = vcmask 130112
    %94 = vst.msk [vmem:[#allocation0] sm:$0x1] %vm93, %v92
    %s96 = sshll.u32 1, 1
    %s97 = ssub.s32 %s96, 1
    %v99 = vld [vmem:[#allocation0] sm:%s97]
    %s100 = sshll.u32 1, 1
    %s101 = ssub.s32 %s100, 1
    %102 = vst [vmem:[%s1] sm:%s101] %v99

// kernel: base_layer.3
$region0: #{base_layer.3}
  #allocation0 [shape = 'u32[]', space=smem, size = 0x4, offset = 0x4, fixed_abs, tag = 'smem constant byte address 0x4 - core index']
  #allocation1 [shape = 'u32[144,128]{1,0:T(1,128)}', space=vmem, size = 0x12000, scoped, tag = 'internal scratch']
  %s0 = inlined_call_operand.vmem [shape: f32[32,128], index: 0, kind: input, shape index: {}]
  %s1 = inlined_call_operand.vmem [shape: f32[1,128], index: 1, kind: input, shape index: {}]
  %s2 = inlined_call_operand.vmem [shape: f32[1,128], index: 2, kind: input, shape index: {}]
  %s3 = inlined_call_operand.vmem [shape: f32[32,128], index: 3, kind: output, shape index: {}]
  %s4 = sld [smem:[#allocation0]]
  $region22: #{base_layer.3} parent=0
    _
  %s6 = ssub.s32 1, %s4
  %s7 = scalar_select 0, %s6, %s4
  // Predicated region
  $region2: #{base_layer.3} parent=0 // pred_check
    _
  $region3: #{base_layer.3} parent=0 // pred_check_branch
    %9 = sbr.rel (0) target = $region5
  $region4: #{base_layer.3} parent=0 // pred_region
    _
  $region5: #{base_layer.3} parent=0 // pred_fallthru
    _
  // Predicated region
  $region6: #{base_layer.3} parent=0 // pred_check
    _
  $region7: #{base_layer.3} parent=0 // pred_check_branch
    %11 = sbr.rel (0) target = $region9
  $region8: #{base_layer.3} parent=0 // pred_region
    _
  $region9: #{base_layer.3} parent=0 // pred_fallthru
    _
  // Predicated region
  $region10: #{base_layer.3} parent=0 // pred_check
    _
  $region11: #{base_layer.3} parent=0 // pred_check_branch
    %13 = sbr.rel (0) target = $region13
  $region12: #{base_layer.3} parent=0 // pred_region
    _
  $region13: #{base_layer.3} parent=0 // pred_fallthru
    _
  %v14 = vld [vmem:[%s0] sm:$0xff]
  %v15 = vld [vmem:[%s0 + $0x8] sm:$0xff]
  %v16 = vld [vmem:[%s0 + $0x10] sm:$0xff]
  %v17 = vld [vmem:[%s0 + $0x18] sm:$0xff]
  %v18 = vld [vmem:[%s1] sm:$0x1]
  %v20 = vlaneseq
  %v21 = vshrl.u32 %v20, 7
  %v22 = vsub.s32 0, %v21
  %v23 = vrot.slane %v18, %v22
  %v25 = vmul.f32 %v14, %v23
  %v26 = vmul.f32 %v15, %v23
  %v27 = vmul.f32 %v16, %v23
  %v28 = vmul.f32 %v17, %v23
  %v29 = vld [vmem:[%s2] sm:$0x1]
  %v31 = vlaneseq
  %v32 = vshrl.u32 %v31, 7
  %v33 = vsub.s32 0, %v32
  %v34 = vrot.slane %v29, %v33
  %v36 = vadd.f32 %v25, %v34
  %v37 = vadd.f32 %v26, %v34
  %v38 = vadd.f32 %v27, %v34
  %v39 = vadd.f32 %v28, %v34
  %v40 = vmul.f32 %v36, 0.5
  %v41 = vmul.f32 %v37, 0.5
  %v42 = vmul.f32 %v38, 0.5
  %v43 = vmul.f32 %v39, 0.5
  %v44 = vmul.f32 %v36, 0.70710677
  %v45 = vmul.f32 %v37, 0.70710677
  %v46 = vmul.f32 %v38, 0.70710677
  %v47 = vmul.f32 %v39, 0.70710677
  %v48 = verf.f32.pop %v44
  %v49 = verf.f32.pop %v45
  %v50 = verf.f32.pop %v46
  %v51 = verf.f32.pop %v47
  %v52 = vadd.f32 %v48, 1.0
  %v53 = vadd.f32 %v49, 1.0
  %v54 = vadd.f32 %v50, 1.0
  %v55 = vadd.f32 %v51, 1.0
  %v56 = vmul.f32 %v40, %v52
  %v57 = vmul.f32 %v41, %v53
  %v58 = vmul.f32 %v42, %v54
  %v59 = vmul.f32 %v43, %v55
  %60 = vst [vmem:[%s3] sm:$0xff] %v56
  %61 = vst [vmem:[%s3 + $0x8] sm:$0xff] %v57
  %62 = vst [vmem:[%s3 + $0x10] sm:$0xff] %v58
  %63 = vst [vmem:[%s3 + $0x18] sm:$0xff] %v59
  // Predicated region
  $region14: #{base_layer.3} parent=0 // pred_check
    _
  $region15: #{base_layer.3} parent=0 // pred_check_branch
    %65 = sbr.rel (0) target = $region17
  $region16: #{base_layer.3} parent=0 // pred_region
    _
  $region17: #{base_layer.3} parent=0 // pred_fallthru
    _
  // Predicated region
  $region18: #{base_layer.3} parent=0 // pred_check
    _
  $region19: #{base_layer.3} parent=0 // pred_check_branch
    %67 = sbr.rel (0) target = $region21
  $region20: #{base_layer.3} parent=0 // pred_region
    _
  $region21: #{base_layer.3} parent=0 // pred_fallthru
    _

// kernel: base_layer.2
$region0: #{base_layer.2}
  #allocation0 [shape = 'u32[]', space=smem, size = 0x4, offset = 0x4, fixed_abs, tag = 'smem constant byte address 0x4 - core index']
  #allocation1 [shape = 'u32[144,128]{1,0:T(1,128)}', space=vmem, size = 0x12000, scoped, tag = 'internal scratch']
  %s0 = inlined_call_operand.vmem [shape: f32[2,18,72], index: 0, kind: input, shape index: {}]
  %s1 = inlined_call_operand.vmem [shape: f32[3,72,128], index: 1, kind: input, shape index: {}]
  %s2 = inlined_call_operand.vmem [shape: f32[128,8], index: 2, kind: input, shape index: {}]
  %s3 = inlined_call_operand.vmem [shape: f32[2,16,128], index: 3, kind: output, shape index: {0}]
  %s4 = inlined_call_operand.vmem [shape: f32[2,2,8], index: 4, kind: output, shape index: {1}]
  %5 = xla_tuple %s3, %s4
  %s6 = sld [smem:[#allocation0]]
  $region53: #{base_layer.2} parent=0
    _
  %s8 = ssub.s32 1, %s6
  %s9 = scalar_select 0, %s8, %s6
  loop: start=0, step=1, limit=4
  $region2: #{base_layer.2} parent=0 // loop_pre_header
    _
  $region3: #{base_layer.2} parent=0 // loop_header
    %s11 = sphi 0, %s15
    %p12 = scmp.ge.s32.totalorder %s11, 4
    %s21 = sphi 0, %s23
    %s24 = sphi 0, %s21
    %s25 = sphi 0, %s24
    %s41 = sphi 0, %s25
    %s45 = sphi 0, %s45
    %s47 = sphi 0, %s45
    %s48 = sphi 0, %s47
    %s62 = sphi 0, %s48
    %s66 = sphi 0, %s66
    %s68 = sphi 0, %s66
    %s69 = sphi 0, %s68
    %s83 = sphi 0, %s69
    %s89 = sphi 0, %s91
    %s92 = sphi 0, %s89
    %s93 = sphi 0, %s92
    %s109 = sphi 0, %s93
    %s115 = sphi 0, %s117
    %s118 = sphi 0, %s115
    %s119 = sphi 0, %s118
    %s135 = sphi 0, %s119
  $region4: #{base_layer.2} parent=0 // loop_header_branch
    %14 = sbr.rel (%p12) target = $region8
  $region5: #{base_layer.2} parent=0 // loop_body
    %s16 = ssub.s32 %s11, 1
    %s17 = ssub.s32 %s11, 2
    %s18 = sadd.s32 %s11, 1
    %s19 = ssub.s32 %s11, %s18
    %p20 = scmp.eq.s32.totalorder %s19, 0
    %s22 = sadd.s32 %s21, 1
    %s23 = scalar_select %p20, %s21, %s22
    %p26 = pneg %p20
    %p27 = scmp.eq.s32.totalorder %s11, 1
    %p28 = por %p26, %p27
    %p29 = scmp.ne.s32.totalorder %s21, %s24
    %p30 = scmp.eq.s32.totalorder %s11, 0
    %p31 = por %p29, %p30
    %p32 = scmp.ne.s32.totalorder %s21, %s24
    %p33 = scmp.eq.s32.totalorder %s16, 1
    %p34 = por %p32, %p33
    %p35 = scmp.ne.s32.totalorder %s24, %s25
    %p36 = scmp.eq.s32.totalorder %s16, 0
    %p37 = por %p35, %p36
    %p38 = scmp.ne.s32.totalorder %s24, %s25
    %p39 = scmp.eq.s32.totalorder %s17, 1
    %p40 = por %p38, %p39
    %p42 = scmp.ne.s32.totalorder %s25, %s41
    %p43 = scmp.eq.s32.totalorder %s17, 0
    %p44 = por %p42, %p43
    %s46 = sadd.s32 %s45, 1
    %p49 = scmp.eq.s32.totalorder %s11, 1
    %p50 = scmp.ne.s32.totalorder %s45, %s47
    %p51 = scmp.eq.s32.totalorder %s11, 0
    %p52 = por %p50, %p51
    %p53 = scmp.ne.s32.totalorder %s45, %s47
    %p54 = scmp.eq.s32.totalorder %s16, 1
    %p55 = por %p53, %p54
    %p56 = scmp.ne.s32.totalorder %s47, %s48
    %p57 = scmp.eq.s32.totalorder %s16, 0
    %p58 = por %p56, %p57
    %p59 = scmp.ne.s32.totalorder %s47, %s48
    %p60 = scmp.eq.s32.totalorder %s17, 1
    %p61 = por %p59, %p60
    %p63 = scmp.ne.s32.totalorder %s48, %s62
    %p64 = scmp.eq.s32.totalorder %s17, 0
    %p65 = por %p63, %p64
    %s67 = sadd.s32 %s66, 1
    %p70 = scmp.eq.s32.totalorder %s11, 1
    %p71 = scmp.ne.s32.totalorder %s66, %s68
    %p72 = scmp.eq.s32.totalorder %s11, 0
    %p73 = por %p71, %p72
    %p74 = scmp.ne.s32.totalorder %s66, %s68
    %p75 = scmp.eq.s32.totalorder %s16, 1
    %p76 = por %p74, %p75
    %p77 = scmp.ne.s32.totalorder %s68, %s69
    %p78 = scmp.eq.s32.totalorder %s16, 0
    %p79 = por %p77, %p78
    %p80 = scmp.ne.s32.totalorder %s68, %s69
    %p81 = scmp.eq.s32.totalorder %s17, 1
    %p82 = por %p80, %p81
    %p84 = scmp.ne.s32.totalorder %s69, %s83
    %p85 = scmp.eq.s32.totalorder %s17, 0
    %p86 = por %p84, %p85
    %s87 = ssub.s32 %s11, %s18
    %p88 = scmp.eq.s32.totalorder %s87, 0
    %s90 = sadd.s32 %s89, 1
    %s91 = scalar_select %p88, %s89, %s90
    %p94 = pneg %p88
    %p95 = scmp.eq.s32.totalorder %s11, 1
    %p96 = por %p94, %p95
    %p97 = scmp.ne.s32.totalorder %s89, %s92
    %p98 = scmp.eq.s32.totalorder %s11, 0
    %p99 = por %p97, %p98
    %p100 = scmp.ne.s32.totalorder %s89, %s92
    %p101 = scmp.eq.s32.totalorder %s16, 1
    %p102 = por %p100, %p101
    %p103 = scmp.ne.s32.totalorder %s92, %s93
    %p104 = scmp.eq.s32.totalorder %s16, 0
    %p105 = por %p103, %p104
    %p106 = scmp.ne.s32.totalorder %s92, %s93
    %p107 = scmp.eq.s32.totalorder %s17, 1
    %p108 = por %p106, %p107
    %p110 = scmp.ne.s32.totalorder %s93, %s109
    %p111 = scmp.eq.s32.totalorder %s17, 0
    %p112 = por %p110, %p111
    %s113 = ssub.s32 %s11, %s18
    %p114 = scmp.eq.s32.totalorder %s113, 0
    %s116 = sadd.s32 %s115, 1
    %s117 = scalar_select %p114, %s115, %s116
    %p120 = pneg %p114
    %p121 = scmp.eq.s32.totalorder %s11, 1
    %p122 = por %p120, %p121
    %p123 = scmp.ne.s32.totalorder %s115, %s118
    %p124 = scmp.eq.s32.totalorder %s11, 0
    %p125 = por %p123, %p124
    %p126 = scmp.ne.s32.totalorder %s115, %s118
    %p127 = scmp.eq.s32.totalorder %s16, 1
    %p128 = por %p126, %p127
    %p129 = scmp.ne.s32.totalorder %s118, %s119
    %p130 = scmp.eq.s32.totalorder %s16, 0
    %p131 = por %p129, %p130
    %p132 = scmp.ne.s32.totalorder %s118, %s119
    %p133 = scmp.eq.s32.totalorder %s17, 1
    %p134 = por %p132, %p133
    %p136 = scmp.ne.s32.totalorder %s119, %s135
    %p137 = scmp.eq.s32.totalorder %s17, 0
    %p138 = por %p136, %p137
    %p139 = scmp.le.s32.totalorder 1, %s11
    %p140 = scmp.lt.s32.totalorder %s11, 3
    %p141 = pnand %p139, %p140
    %p142 = pneg %p141
    // Predicated region
    $region9: #{base_layer.2} parent=5 // pred_check
      _
    $region10: #{base_layer.2} parent=5 // pred_check_branch
      %144 = sbr.rel (%p141) target = $region12
    $region11: #{base_layer.2} parent=5 // pred_region
      %s145 = ssub.s32 %s11, 1
      // Predicated region
      $region13: #{base_layer.2} parent=11 // pred_check
        %p146 = pneg %p58
      $region14: #{base_layer.2} parent=11 // pred_check_branch
        %148 = sbr.rel (%p146) target = $region16
      $region15: #{base_layer.2} parent=11 // pred_region
        _
      $region16: #{base_layer.2} parent=11 // pred_fallthru
        _
      // Predicated region
      $region17: #{base_layer.2} parent=11 // pred_check
        %p149 = pneg %p79
      $region18: #{base_layer.2} parent=11 // pred_check_branch
        %151 = sbr.rel (%p149) target = $region20
      $region19: #{base_layer.2} parent=11 // pred_region
        _
      $region20: #{base_layer.2} parent=11 // pred_fallthru
        _
    $region12: #{base_layer.2} parent=5 // pred_fallthru
      _
    %p152 = scmp.lt.s32.totalorder %s11, 2
    // Predicated region
    $region21: #{base_layer.2} parent=5 // pred_check
      %p153 = pneg %p152
    $region22: #{base_layer.2} parent=5 // pred_check_branch
      %155 = sbr.rel (%p153) target = $region24
    $region23: #{base_layer.2} parent=5 // pred_region
      // Predicated region
      $region25: #{base_layer.2} parent=23 // pred_check
        %p156 = pneg %p31
      $region26: #{base_layer.2} parent=23 // pred_check_branch
        %158 = sbr.rel (%p156) target = $region28
      $region27: #{base_layer.2} parent=23 // pred_region
        %p159 = scmp.lt.s32.totalorder %s11, 1
        %s160 = scalar_select %p159, %s11, 1
        %s161 = smul.addr %s160, 3
        %s162 = smul.addr %s161, 8
        %s163 = scalar_lea.vmem %s0, %s162
      $region28: #{base_layer.2} parent=23 // pred_fallthru
        _
    $region24: #{base_layer.2} parent=5 // pred_fallthru
      _
    %p164 = scmp.le.s32.totalorder 1, %s11
    %p165 = scmp.lt.s32.totalorder %s11, 3
    %p166 = pnand %p164, %p165
    %p167 = pneg %p166
    // Predicated region
    $region29: #{base_layer.2} parent=5 // pred_check
      _
    $region30: #{base_layer.2} parent=5 // pred_check_branch
      %169 = sbr.rel (%p166) target = $region32
    $region31: #{base_layer.2} parent=5 // pred_region
      %s170 = ssub.s32 %s11, 1
      %p171 = scmp.lt.s32.totalorder %s16, 1
      %s172 = scalar_select %p171, %s16, 1
      %s173 = smul.addr %s172, 3
      %s174 = smul.addr %s173, 8
      %s175 = scalar_lea.vmem %s0, %s174
      %p176 = pneg %p37
      %p177 = pneg %p34
      %p178 = pneg %p58
      %p179 = pneg %p55
      %p180 = pneg %p79
      %p181 = pneg %p76
      %p182 = pneg %p105
      %p183 = pneg %p102
      %p184 = scmp.lt.s32.totalorder %s16, 1
      %s185 = scalar_select %p184, %s16, 1
      %s186 = smul.addr %s185, 2
      %s187 = smul.addr %s186, 8
      %s188 = scalar_lea.vmem %s3, %s187
      %p189 = pneg %p131
      %p190 = pneg %p128
      %p191 = scmp.lt.s32.totalorder %s16, 1
      %s192 = scalar_select %p191, %s16, 1
      %s193 = smul.addr %s192, 2
      %s194 = scalar_lea.vmem %s4, %s193
      %p195 = scmp.lt.s32.totalorder %s16, 1
      %s196 = scalar_select %p195, %s16, 1
      %s197 = smul.addr %s196, 3
      %s198 = smul.addr %s197, 8
      %s199 = scalar_lea.vmem %s0, %s198
      %p200 = scmp.lt.s32.totalorder %s16, 1
      %s201 = scalar_select %p200, %s16, 1
      %s202 = smul.addr %s201, 2
      %s203 = smul.addr %s202, 8
      %s204 = scalar_lea.vmem %s3, %s203
      %p205 = scmp.lt.s32.totalorder %s16, 1
      %s206 = scalar_select %p205, %s16, 1
      %s207 = smul.addr %s206, 2
      %s208 = scalar_lea.vmem %s4, %s207
      %v209 = vld [vmem:[%s199] sm:$0xff]
      %v210 = vld [vmem:[%s199 + $0x8] sm:$0xff]
      %v211 = vld [vmem:[%s199 + $0x10] sm:$0x3]
      %v212 = vld [vmem:[%s1] sm:$0xff]
      %v213 = vld [vmem:[%s1 + $0x8] sm:$0xff]
      %v214 = vld [vmem:[%s1 + $0x10] sm:$0xff]
      %v215 = vld [vmem:[%s1 + $0x18] sm:$0xff]
      %v216 = vld [vmem:[%s1 + $0x20] sm:$0xff]
      %v217 = vld [vmem:[%s1 + $0x28] sm:$0xff]
      %v218 = vld [vmem:[%s1 + $0x30] sm:$0xff]
      %v219 = vld [vmem:[%s1 + $0x38] sm:$0xff]
      %v220 = vld [vmem:[%s1 + $0x40] sm:$0xff]
      %s221 = scalar_lea.vmem %s1, 72
      %v222 = vld [vmem:[%s221] sm:$0xff]
      %v223 = vld [vmem:[%s221 + $0x8] sm:$0xff]
      %v224 = vld [vmem:[%s221 + $0x10] sm:$0xff]
      %v225 = vld [vmem:[%s221 + $0x18] sm:$0xff]
      %v226 = vld [vmem:[%s221 + $0x20] sm:$0xff]
      %v227 = vld [vmem:[%s221 + $0x28] sm:$0xff]
      %v228 = vld [vmem:[%s221 + $0x30] sm:$0xff]
      %v229 = vld [vmem:[%s221 + $0x38] sm:$0xff]
      %v230 = vld [vmem:[%s221 + $0x40] sm:$0xff]
      %vm234 = vcmask 1046528
      %v235 = vrot.slane %v209, 1
      %v236 = vrot.slane %v210, 1
      %v237 = vsel %vm234, %v235, %v236
      %v238 = vrot.slane %v211, 1
      %v239 = vsel %vm234, %v236, %v238
      %vm240 = vcmask 588800
      %v241 = vsel %vm240, %v237, 0
      %v243 = vsel %vm240, %v239, 0
      %245 = vmatprep.subr.mxu0 0.0
      %246 = vmatpush1.msra.mxu0 0.0
      %247 = vmatprep.subr.mxu0 0.0
      %248 = vmatpush1.msra.mxu0 0.0
      %249 = vmatprep.subr.mxu0 0.0
      %250 = vmatpush1.msra.mxu0 0.0
      %251 = vmatprep.subr.mxu0 0.0
      %252 = vmatpush1.msra.mxu0 0.0
      %253 = vmatprep.subr.mxu0 0.0
      %254 = vmatpush1.msra.mxu0 0.0
      %255 = vmatprep.subr.mxu0 0.0
      %256 = vmatpush1.msra.mxu0 0.0
      %257 = vmatprep.subr.mxu0 0.0
      %258 = vmatpush1.msra.mxu0 0.0
      %259 = vmatprep.subr.mxu0 0.0
      %260 = vmatpush1.msra.mxu0 %v230
      %261 = vmatprep.subr.mxu0 0.0
      %262 = vmatpush1.msra.mxu0 %v229
      %263 = vmatprep.subr.mxu0 0.0
      %264 = vmatpush1.msra.mxu0 %v228
      %265 = vmatprep.subr.mxu0 0.0
      %266 = vmatpush1.msra.mxu0 %v227
      %267 = vmatprep.subr.mxu0 0.0
      %268 = vmatpush1.msra.mxu0 %v226
      %269 = vmatprep.subr.mxu0 0.0
      %270 = vmatpush1.msra.mxu0 %v225
      %271 = vmatprep.subr.mxu0 0.0
      %272 = vmatpush1.msra.mxu0 %v224
      %273 = vmatprep.subr.mxu0 0.0
      %274 = vmatpush1.msra.mxu0 %v223
      %275 = vmatprep.subr.mxu0 0.0
      %276 = vmatpush1.msra.mxu0 %v222
      %277 = vmatprep.subr.mxu0 0.0
      %278 = vmatpush2.msra.mxu0 0.0
      %279 = vmatprep.subr.mxu0 0.0
      %280 = vmatpush2.msra.mxu0 0.0
      %281 = vmatprep.subr.mxu0 0.0
      %282 = vmatpush2.msra.mxu0 0.0
      %283 = vmatprep.subr.mxu0 0.0
      %284 = vmatpush2.msra.mxu0 0.0
      %285 = vmatprep.subr.mxu0 0.0
      %286 = vmatpush2.msra.mxu0 0.0
      %287 = vmatprep.subr.mxu0 0.0
      %288 = vmatpush2.msra.mxu0 0.0
      %289 = vmatprep.subr.mxu0 0.0
      %290 = vmatpush2.msra.mxu0 0.0
      %291 = vmatprep.subr.mxu0 0.0
      %292 = vmatpush2.msra.mxu0 0.0
      %293 = vmatprep.subr.mxu0 0.0
      %294 = vmatpush2.msra.mxu0 0.0
      %295 = vmatprep.subr.mxu0 0.0
      %296 = vmatpush2.msra.mxu0 0.0
      %297 = vmatprep.subr.mxu0 0.0
      %298 = vmatpush2.msra.mxu0 0.0
      %299 = vmatprep.subr.mxu0 0.0
      %300 = vmatpush2.msra.mxu0 0.0
      %301 = vmatprep.subr.mxu0 0.0
      %302 = vmatpush2.msra.mxu0 0.0
      %303 = vmatprep.subr.mxu0 0.0
      %304 = vmatpush2.msra.mxu0 0.0
      %305 = vmatprep.subr.mxu0 0.0
      %306 = vmatpush2.msra.mxu0 0.0
      %307 = vmatprep.subr.mxu0 0.0
      %308 = vmatpush2.msra.mxu0 0.0
      %309 = vmatprep.mubr.f32.mxu0 0.0
      %310 = vmatmul.mubr.f32.gmra.mxu0 %v241
      %v311 = vpop.f32.mrf.mxu0
      %v312 = vadd.f32 0.0, %v311
      %v313 = vpop.f32.mrf.mxu0
      %314 = vmatprep.mubr.f32.mxu0 0.0
      %315 = vmatmul.mubr.f32.gmra.mxu0 %v243
      %v316 = vpop.f32.mrf.mxu0
      %v317 = vadd.f32 0.0, %v316
      %v318 = vpop.f32.mrf.mxu0
      %319 = vdwg.mxu0
      %v320 = vsel %vm240, %v209, 0
      %v322 = vsel %vm240, %v210, 0
      %324 = vmatprep.subr.mxu0 0.0
      %325 = vmatpush1.msra.mxu0 0.0
      %326 = vmatprep.subr.mxu0 0.0
      %327 = vmatpush1.msra.mxu0 0.0
      %328 = vmatprep.subr.mxu0 0.0
      %329 = vmatpush1.msra.mxu0 0.0
      %330 = vmatprep.subr.mxu0 0.0
      %331 = vmatpush1.msra.mxu0 0.0
      %332 = vmatprep.subr.mxu0 0.0
      %333 = vmatpush1.msra.mxu0 0.0
      %334 = vmatprep.subr.mxu0 0.0
      %335 = vmatpush1.msra.mxu0 0.0
      %336 = vmatprep.subr.mxu0 0.0
      %337 = vmatpush1.msra.mxu0 0.0
      %338 = vmatprep.subr.mxu0 0.0
      %339 = vmatpush1.msra.mxu0 %v220
      %340 = vmatprep.subr.mxu0 0.0
      %341 = vmatpush1.msra.mxu0 %v219
      %342 = vmatprep.subr.mxu0 0.0
      %343 = vmatpush1.msra.mxu0 %v218
      %344 = vmatprep.subr.mxu0 0.0
      %345 = vmatpush1.msra.mxu0 %v217
      %346 = vmatprep.subr.mxu0 0.0
      %347 = vmatpush1.msra.mxu0 %v216
      %348 = vmatprep.subr.mxu0 0.0
      %349 = vmatpush1.msra.mxu0 %v215
      %350 = vmatprep.subr.mxu0 0.0
      %351 = vmatpush1.msra.mxu0 %v214
      %352 = vmatprep.subr.mxu0 0.0
      %353 = vmatpush1.msra.mxu0 %v213
      %354 = vmatprep.subr.mxu0 0.0
      %355 = vmatpush1.msra.mxu0 %v212
      %356 = vmatprep.subr.mxu0 0.0
      %357 = vmatpush2.msra.mxu0 0.0
      %358 = vmatprep.subr.mxu0 0.0
      %359 = vmatpush2.msra.mxu0 0.0
      %360 = vmatprep.subr.mxu0 0.0
      %361 = vmatpush2.msra.mxu0 0.0
      %362 = vmatprep.subr.mxu0 0.0
      %363 = vmatpush2.msra.mxu0 0.0
      %364 = vmatprep.subr.mxu0 0.0
      %365 = vmatpush2.msra.mxu0 0.0
      %366 = vmatprep.subr.mxu0 0.0
      %367 = vmatpush2.msra.mxu0 0.0
      %368 = vmatprep.subr.mxu0 0.0
      %369 = vmatpush2.msra.mxu0 0.0
      %370 = vmatprep.subr.mxu0 0.0
      %371 = vmatpush2.msra.mxu0 0.0
      %372 = vmatprep.subr.mxu0 0.0
      %373 = vmatpush2.msra.mxu0 0.0
      %374 = vmatprep.subr.mxu0 0.0
      %375 = vmatpush2.msra.mxu0 0.0
      %376 = vmatprep.subr.mxu0 0.0
      %377 = vmatpush2.msra.mxu0 0.0
      %378 = vmatprep.subr.mxu0 0.0
      %379 = vmatpush2.msra.mxu0 0.0
      %380 = vmatprep.subr.mxu0 0.0
      %381 = vmatpush2.msra.mxu0 0.0
      %382 = vmatprep.subr.mxu0 0.0
      %383 = vmatpush2.msra.mxu0 0.0
      %384 = vmatprep.subr.mxu0 0.0
      %385 = vmatpush2.msra.mxu0 0.0
      %386 = vmatprep.subr.mxu0 0.0
      %387 = vmatpush2.msra.mxu0 0.0
      %388 = vmatprep.mubr.f32.mxu0 0.0
      %389 = vmatmul.mubr.f32.gmra.mxu0 %v320
      %v390 = vpop.f32.mrf.mxu0
      %v391 = vadd.f32 %v312, %v390
      %v392 = vpop.f32.mrf.mxu0
      %393 = vmatprep.mubr.f32.mxu0 0.0
      %394 = vmatmul.mubr.f32.gmra.mxu0 %v322
      %v395 = vpop.f32.mrf.mxu0
      %v396 = vadd.f32 %v317, %v395
      %v397 = vpop.f32.mrf.mxu0
      %398 = vdwg.mxu0
      %s399 = scalar_lea.vmem %s1, 144
      %v400 = vld [vmem:[%s399] sm:$0xff]
      %v401 = vld [vmem:[%s399 + $0x8] sm:$0xff]
      %v402 = vld [vmem:[%s399 + $0x10] sm:$0xff]
      %v403 = vld [vmem:[%s399 + $0x18] sm:$0xff]
      %v404 = vld [vmem:[%s399 + $0x20] sm:$0xff]
      %v405 = vld [vmem:[%s399 + $0x28] sm:$0xff]
      %v406 = vld [vmem:[%s399 + $0x30] sm:$0xff]
      %v407 = vld [vmem:[%s399 + $0x38] sm:$0xff]
      %v408 = vld [vmem:[%s399 + $0x40] sm:$0xff]
      %vm409 = vcmask 1045504
      %v410 = vrot.slane %v209, 2
      %v411 = vrot.slane %v210, 2
      %v412 = vsel %vm409, %v410, %v411
      %v413 = vrot.slane %v211, 2
      %v414 = vsel %vm409, %v411, %v413
      %v415 = vsel %vm240, %v412, 0
      %v417 = vsel %vm240, %v414, 0
      %419 = vmatprep.subr.mxu0 0.0
      %420 = vmatpush1.msra.mxu0 0.0
      %421 = vmatprep.subr.mxu0 0.0
      %422 = vmatpush1.msra.mxu0 0.0
      %423 = vmatprep.subr.mxu0 0.0
      %424 = vmatpush1.msra.mxu0 0.0
      %425 = vmatprep.subr.mxu0 0.0
      %426 = vmatpush1.msra.mxu0 0.0
      %427 = vmatprep.subr.mxu0 0.0
      %428 = vmatpush1.msra.mxu0 0.0
      %429 = vmatprep.subr.mxu0 0.0
      %430 = vmatpush1.msra.mxu0 0.0
      %431 = vmatprep.subr.mxu0 0.0
      %432 = vmatpush1.msra.mxu0 0.0
      %433 = vmatprep.subr.mxu0 0.0
      %434 = vmatpush1.msra.mxu0 %v408
      %435 = vmatprep.subr.mxu0 0.0
      %436 = vmatpush1.msra.mxu0 %v407
      %437 = vmatprep.subr.mxu0 0.0
      %438 = vmatpush1.msra.mxu0 %v406
      %439 = vmatprep.subr.mxu0 0.0
      %440 = vmatpush1.msra.mxu0 %v405
      %441 = vmatprep.subr.mxu0 0.0
      %442 = vmatpush1.msra.mxu0 %v404
      %443 = vmatprep.subr.mxu0 0.0
      %444 = vmatpush1.msra.mxu0 %v403
      %445 = vmatprep.subr.mxu0 0.0
      %446 = vmatpush1.msra.mxu0 %v402
      %447 = vmatprep.subr.mxu0 0.0
      %448 = vmatpush1.msra.mxu0 %v401
      %449 = vmatprep.subr.mxu0 0.0
      %450 = vmatpush1.msra.mxu0 %v400
      %451 = vmatprep.subr.mxu0 0.0
      %452 = vmatpush2.msra.mxu0 0.0
      %453 = vmatprep.subr.mxu0 0.0
      %454 = vmatpush2.msra.mxu0 0.0
      %455 = vmatprep.subr.mxu0 0.0
      %456 = vmatpush2.msra.mxu0 0.0
      %457 = vmatprep.subr.mxu0 0.0
      %458 = vmatpush2.msra.mxu0 0.0
      %459 = vmatprep.subr.mxu0 0.0
      %460 = vmatpush2.msra.mxu0 0.0
      %461 = vmatprep.subr.mxu0 0.0
      %462 = vmatpush2.msra.mxu0 0.0
      %463 = vmatprep.subr.mxu0 0.0
      %464 = vmatpush2.msra.mxu0 0.0
      %465 = vmatprep.subr.mxu0 0.0
      %466 = vmatpush2.msra.mxu0 0.0
      %467 = vmatprep.subr.mxu0 0.0
      %468 = vmatpush2.msra.mxu0 0.0
      %469 = vmatprep.subr.mxu0 0.0
      %470 = vmatpush2.msra.mxu0 0.0
      %471 = vmatprep.subr.mxu0 0.0
      %472 = vmatpush2.msra.mxu0 0.0
      %473 = vmatprep.subr.mxu0 0.0
      %474 = vmatpush2.msra.mxu0 0.0
      %475 = vmatprep.subr.mxu0 0.0
      %476 = vmatpush2.msra.mxu0 0.0
      %477 = vmatprep.subr.mxu0 0.0
      %478 = vmatpush2.msra.mxu0 0.0
      %479 = vmatprep.subr.mxu0 0.0
      %480 = vmatpush2.msra.mxu0 0.0
      %481 = vmatprep.subr.mxu0 0.0
      %482 = vmatpush2.msra.mxu0 0.0
      %483 = vmatprep.mubr.f32.mxu0 0.0
      %484 = vmatmul.mubr.f32.gmra.mxu0 %v415
      %v485 = vpop.f32.mrf.mxu0
      %v486 = vadd.f32 0.0, %v485
      %v487 = vpop.f32.mrf.mxu0
      %488 = vmatprep.mubr.f32.mxu0 0.0
      %489 = vmatmul.mubr.f32.gmra.mxu0 %v417
      %v490 = vpop.f32.mrf.mxu0
      %v491 = vadd.f32 0.0, %v490
      %v492 = vpop.f32.mrf.mxu0
      %493 = vdwg.mxu0
      %v494 = vadd.f32 %v391, %v486
      %v495 = vadd.f32 %v396, %v491
      %496 = vst [vmem:[%s204] sm:$0xff] %v494
      %497 = vst [vmem:[%s204 + $0x8] sm:$0xff] %v495
      %v498 = vld [vmem:[%s2] sm:$0xff]
      %v499 = vld [vmem:[%s2 + $0x8] sm:$0xff]
      %v500 = vld [vmem:[%s2 + $0x10] sm:$0xff]
      %v501 = vld [vmem:[%s2 + $0x18] sm:$0xff]
      %v502 = vld [vmem:[%s2 + $0x20] sm:$0xff]
      %v503 = vld [vmem:[%s2 + $0x28] sm:$0xff]
      %v504 = vld [vmem:[%s2 + $0x30] sm:$0xff]
      %v505 = vld [vmem:[%s2 + $0x38] sm:$0xff]
      %v506 = vld [vmem:[%s2 + $0x40] sm:$0xff]
      %v507 = vld [vmem:[%s2 + $0x48] sm:$0xff]
      %v508 = vld [vmem:[%s2 + $0x50] sm:$0xff]
      %v509 = vld [vmem:[%s2 + $0x58] sm:$0xff]
      %v510 = vld [vmem:[%s2 + $0x60] sm:$0xff]
      %v511 = vld [vmem:[%s2 + $0x68] sm:$0xff]
      %v512 = vld [vmem:[%s2 + $0x70] sm:$0xff]
      %v513 = vld [vmem:[%s2 + $0x78] sm:$0xff]
      %514 = vmatprep.subr.mxu0 0.0
      %515 = vmatpush1.msra.mxu0 %v513
      %516 = vmatprep.subr.mxu0 0.0
      %517 = vmatpush1.msra.mxu0 %v512
      %518 = vmatprep.subr.mxu0 0.0
      %519 = vmatpush1.msra.mxu0 %v511
      %520 = vmatprep.subr.mxu0 0.0
      %521 = vmatpush1.msra.mxu0 %v510
      %522 = vmatprep.subr.mxu0 0.0
      %523 = vmatpush1.msra.mxu0 %v509
      %524 = vmatprep.subr.mxu0 0.0
      %525 = vmatpush1.msra.mxu0 %v508
      %526 = vmatprep.subr.mxu0 0.0
      %527 = vmatpush1.msra.mxu0 %v507
      %528 = vmatprep.subr.mxu0 0.0
      %529 = vmatpush1.msra.mxu0 %v506
      %530 = vmatprep.subr.mxu0 0.0
      %531 = vmatpush1.msra.mxu0 %v505
      %532 = vmatprep.subr.mxu0 0.0
      %533 = vmatpush1.msra.mxu0 %v504
      %534 = vmatprep.subr.mxu0 0.0
      %535 = vmatpush1.msra.mxu0 %v503
      %536 = vmatprep.subr.mxu0 0.0
      %537 = vmatpush1.msra.mxu0 %v502
      %538 = vmatprep.subr.mxu0 0.0
      %539 = vmatpush1.msra.mxu0 %v501
      %540 = vmatprep.subr.mxu0 0.0
      %541 = vmatpush1.msra.mxu0 %v500
      %542 = vmatprep.subr.mxu0 0.0
      %543 = vmatpush1.msra.mxu0 %v499
      %544 = vmatprep.subr.mxu0 0.0
      %545 = vmatpush1.msra.mxu0 %v498
      %546 = vmatprep.subr.mxu0 0.0
      %547 = vmatpush2.msra.mxu0 0.0
      %548 = vmatprep.subr.mxu0 0.0
      %549 = vmatpush2.msra.mxu0 0.0
      %550 = vmatprep.subr.mxu0 0.0
      %551 = vmatpush2.msra.mxu0 0.0
      %552 = vmatprep.subr.mxu0 0.0
      %553 = vmatpush2.msra.mxu0 0.0
      %554 = vmatprep.subr.mxu0 0.0
      %555 = vmatpush2.msra.mxu0 0.0
      %556 = vmatprep.subr.mxu0 0.0
      %557 = vmatpush2.msra.mxu0 0.0
      %558 = vmatprep.subr.mxu0 0.0
      %559 = vmatpush2.msra.mxu0 0.0
      %560 = vmatprep.subr.mxu0 0.0
      %561 = vmatpush2.msra.mxu0 0.0
      %562 = vmatprep.subr.mxu0 0.0
      %563 = vmatpush2.msra.mxu0 0.0
      %564 = vmatprep.subr.mxu0 0.0
      %565 = vmatpush2.msra.mxu0 0.0
      %566 = vmatprep.subr.mxu0 0.0
      %567 = vmatpush2.msra.mxu0 0.0
      %568 = vmatprep.subr.mxu0 0.0
      %569 = vmatpush2.msra.mxu0 0.0
      %570 = vmatprep.subr.mxu0 0.0
      %571 = vmatpush2.msra.mxu0 0.0
      %572 = vmatprep.subr.mxu0 0.0
      %573 = vmatpush2.msra.mxu0 0.0
      %574 = vmatprep.subr.mxu0 0.0
      %575 = vmatpush2.msra.mxu0 0.0
      %576 = vmatprep.subr.mxu0 0.0
      %577 = vmatpush2.msra.mxu0 0.0
      %578 = vmatprep.mubr.f32.mxu0 0.0
      %579 = vmatmul.mubr.f32.gmra.mxu0 %v494
      %v580 = vpop.f32.mrf.mxu0
      %v581 = vadd.f32 0.0, %v580
      %v582 = vpop.f32.mrf.mxu0
      %583 = vmatprep.mubr.f32.mxu0 0.0
      %584 = vmatmul.mubr.f32.gmra.mxu0 %v495
      %v585 = vpop.f32.mrf.mxu0
      %v586 = vadd.f32 0.0, %v585
      %v587 = vpop.f32.mrf.mxu0
      %588 = vdwg.mxu0
      %vm589 = vcmask 64512
      %v590 = vsel %vm589, %v581, 0.0
      %v591 = vsel %vm589, %v586, 0.0
      %v592 = vadd.f32 %v590, %v591
      %v593 = vrot.slane %v592, 4
      %v594 = vadd.f32 %v592, %v593
      %v595 = vrot.slane %v594, 2
      %v596 = vadd.f32 %v594, %v595
      %v597 = vrot.slane %v596, 1
      %v598 = vadd.f32 %v596, %v597
      %v599 = vmul.f32 %v494, %v494
      %v600 = vmul.f32 %v495, %v495
      %601 = vmatprep.subr.mxu0 0.0
      %602 = vmatpush1.msra.mxu0 %v513
      %603 = vmatprep.subr.mxu0 0.0
      %604 = vmatpush1.msra.mxu0 %v512
      %605 = vmatprep.subr.mxu0 0.0
      %606 = vmatpush1.msra.mxu0 %v511
      %607 = vmatprep.subr.mxu0 0.0
      %608 = vmatpush1.msra.mxu0 %v510
      %609 = vmatprep.subr.mxu0 0.0
      %610 = vmatpush1.msra.mxu0 %v509
      %611 = vmatprep.subr.mxu0 0.0
      %612 = vmatpush1.msra.mxu0 %v508
      %613 = vmatprep.subr.mxu0 0.0
      %614 = vmatpush1.msra.mxu0 %v507
      %615 = vmatprep.subr.mxu0 0.0
      %616 = vmatpush1.msra.mxu0 %v506
      %617 = vmatprep.subr.mxu0 0.0
      %618 = vmatpush1.msra.mxu0 %v505
      %619 = vmatprep.subr.mxu0 0.0
      %620 = vmatpush1.msra.mxu0 %v504
      %621 = vmatprep.subr.mxu0 0.0
      %622 = vmatpush1.msra.mxu0 %v503
      %623 = vmatprep.subr.mxu0 0.0
      %624 = vmatpush1.msra.mxu0 %v502
      %625 = vmatprep.subr.mxu0 0.0
      %626 = vmatpush1.msra.mxu0 %v501
      %627 = vmatprep.subr.mxu0 0.0
      %628 = vmatpush1.msra.mxu0 %v500
      %629 = vmatprep.subr.mxu0 0.0
      %630 = vmatpush1.msra.mxu0 %v499
      %631 = vmatprep.subr.mxu0 0.0
      %632 = vmatpush1.msra.mxu0 %v498
      %633 = vmatprep.subr.mxu0 0.0
      %634 = vmatpush2.msra.mxu0 0.0
      %635 = vmatprep.subr.mxu0 0.0
      %636 = vmatpush2.msra.mxu0 0.0
      %637 = vmatprep.subr.mxu0 0.0
      %638 = vmatpush2.msra.mxu0 0.0
      %639 = vmatprep.subr.mxu0 0.0
      %640 = vmatpush2.msra.mxu0 0.0
      %641 = vmatprep.subr.mxu0 0.0
      %642 = vmatpush2.msra.mxu0 0.0
      %643 = vmatprep.subr.mxu0 0.0
      %644 = vmatpush2.msra.mxu0 0.0
      %645 = vmatprep.subr.mxu0 0.0
      %646 = vmatpush2.msra.mxu0 0.0
      %647 = vmatprep.subr.mxu0 0.0
      %648 = vmatpush2.msra.mxu0 0.0
      %649 = vmatprep.subr.mxu0 0.0
      %650 = vmatpush2.msra.mxu0 0.0
      %651 = vmatprep.subr.mxu0 0.0
      %652 = vmatpush2.msra.mxu0 0.0
      %653 = vmatprep.subr.mxu0 0.0
      %654 = vmatpush2.msra.mxu0 0.0
      %655 = vmatprep.subr.mxu0 0.0
      %656 = vmatpush2.msra.mxu0 0.0
      %657 = vmatprep.subr.mxu0 0.0
      %658 = vmatpush2.msra.mxu0 0.0
      %659 = vmatprep.subr.mxu0 0.0
      %660 = vmatpush2.msra.mxu0 0.0
      %661 = vmatprep.subr.mxu0 0.0
      %662 = vmatpush2.msra.mxu0 0.0
      %663 = vmatprep.subr.mxu0 0.0
      %664 = vmatpush2.msra.mxu0 0.0
      %665 = vmatprep.mubr.f32.mxu0 0.0
      %666 = vmatmul.mubr.f32.gmra.mxu0 %v599
      %v667 = vpop.f32.mrf.mxu0
      %v668 = vadd.f32 0.0, %v667
      %v669 = vpop.f32.mrf.mxu0
      %670 = vmatprep.mubr.f32.mxu0 0.0
      %671 = vmatmul.mubr.f32.gmra.mxu0 %v600
      %v672 = vpop.f32.mrf.mxu0
      %v673 = vadd.f32 0.0, %v672
      %v674 = vpop.f32.mrf.mxu0
      %675 = vdwg.mxu0
      %v676 = vsel %vm589, %v668, 0.0
      %v677 = vsel %vm589, %v673, 0.0
      %v678 = vadd.f32 %v676, %v677
      %v679 = vrot.slane %v678, 4
      %v680 = vadd.f32 %v678, %v679
      %v681 = vrot.slane %v680, 2
      %v682 = vadd.f32 %v680, %v681
      %v683 = vrot.slane %v682, 1
      %v684 = vadd.f32 %v682, %v683
      %vm685 = vcmask 1040384
      %v686 = vsel %vm685, %v598, %v684
      %vm687 = vcmask 58368
      %688 = vst.msk [vmem:[%s208] sm:$0x3] %vm687, %v686
      %p689 = scmp.lt.s32.totalorder %s16, 1
      %s690 = scalar_select %p689, %s16, 1
      %s691 = smul.addr %s690, 2
      %s692 = smul.addr %s691, 8
      %s693 = scalar_lea.vmem %s3, %s692
      %p694 = scmp.lt.s32.totalorder %s16, 1
      %s695 = scalar_select %p694, %s16, 1
      %s696 = smul.addr %s695, 2
      %s697 = scalar_lea.vmem %s4, %s696
      // Predicated region
      $region33: #{base_layer.2} parent=31 // pred_check
        %p698 = pneg %p102
      $region34: #{base_layer.2} parent=31 // pred_check_branch
        %700 = sbr.rel (%p698) target = $region36
      $region35: #{base_layer.2} parent=31 // pred_region
        _
      $region36: #{base_layer.2} parent=31 // pred_fallthru
        _
      // Predicated region
      $region37: #{base_layer.2} parent=31 // pred_check
        %p701 = pneg %p128
      $region38: #{base_layer.2} parent=31 // pred_check_branch
        %703 = sbr.rel (%p701) target = $region40
      $region39: #{base_layer.2} parent=31 // pred_region
        _
      $region40: #{base_layer.2} parent=31 // pred_fallthru
        _
    $region32: #{base_layer.2} parent=5 // pred_fallthru
      _
    %p704 = scmp.le.s32.totalorder 2, %s11
    // Predicated region
    $region41: #{base_layer.2} parent=5 // pred_check
      %p705 = pneg %p704
    $region42: #{base_layer.2} parent=5 // pred_check_branch
      %707 = sbr.rel (%p705) target = $region44
    $region43: #{base_layer.2} parent=5 // pred_region
      %s708 = ssub.s32 %s11, 2
      // Predicated region
      $region45: #{base_layer.2} parent=43 // pred_check
        %p709 = pneg %p108
      $region46: #{base_layer.2} parent=43 // pred_check_branch
        %711 = sbr.rel (%p709) target = $region48
      $region47: #{base_layer.2} parent=43 // pred_region
        %p712 = scmp.lt.s32.totalorder %s17, 1
        %s713 = scalar_select %p712, %s17, 1
        %s714 = smul.addr %s713, 2
        %s715 = smul.addr %s714, 8
        %s716 = scalar_lea.vmem %s3, %s715
      $region48: #{base_layer.2} parent=43 // pred_fallthru
        _
      // Predicated region
      $region49: #{base_layer.2} parent=43 // pred_check
        %p717 = pneg %p134
      $region50: #{base_layer.2} parent=43 // pred_check_branch
        %719 = sbr.rel (%p717) target = $region52
      $region51: #{base_layer.2} parent=43 // pred_region
        %p720 = scmp.lt.s32.totalorder %s17, 1
        %s721 = scalar_select %p720, %s17, 1
        %s722 = smul.addr %s721, 2
        %s723 = scalar_lea.vmem %s4, %s722
      $region52: #{base_layer.2} parent=43 // pred_fallthru
        _
    $region44: #{base_layer.2} parent=5 // pred_fallthru
      _
  $region6: #{base_layer.2} parent=0 // loop_footer
    %s15 = sadd.s32 1, %s11
  $region7: #{base_layer.2} parent=0 // loop_footer_branch
    %10 = sbr.rel target = $region3
  $region8: #{base_layer.2} parent=0 // loop_exit
    _

</llo_original>
